<compile_context>
chip_gen: v7x
topology: tpu7x:2x2x1
jax: 0.10.0
libtpu: 0.0.40
codegen_flags: <defaults>
</compile_context>

<pallas_src>
import math
import functools

import jax
import jax.numpy as jnp
from jax.experimental import pallas as pl
from jax.experimental.pallas import tpu as pltpu

BN_EPS = 1e-5
SUB = 16          # sublane padding granularity (safe for packed bf16 tiles)
LANES = 512       # lane width used by the elementwise kernels


def round_up(x, m):
    return (x + m - 1) // m * m


# ------------------------------------------------------------------
# Pallas kernels
# ------------------------------------------------------------------
def _matmul_kernel(*refs, activation):
    """Tiled GEMM: bf16 operands -> f32 MXU accumulation -> fused f32 epilogue.

    refs = (a, b, scale, shift[, sig_mask], out, acc_scratch)
    """
    if activation == "sigmoid_mask":
        a_ref, b_ref, scale_ref, shift_ref, mask_ref, o_ref, acc_ref = refs
    else:
        a_ref, b_ref, scale_ref, shift_ref, o_ref, acc_ref = refs
        mask_ref = None

    k = pl.program_id(2)               # read grid ids at kernel top level only
    k_last = pl.num_programs(2) - 1

    @pl.when(k == 0)
    def _():
        acc_ref[...] = jnp.zeros_like(acc_ref)

    acc_ref[...] += jnp.dot(a_ref[...], b_ref[...],
                            preferred_element_type=jnp.float32)

    @pl.when(k == k_last)
    def _():
        y = acc_ref[...] * scale_ref[...] + shift_ref[...]
        if activation == "relu":
            y = jnp.maximum(y, 0.0)
        elif activation == "sigmoid":
            y = jax.nn.sigmoid(y)
        elif activation == "sigmoid_mask":
            # fused heads: sigmoid only on the columns flagged by the mask
            y = jnp.where(mask_ref[...] > 0.0, jax.nn.sigmoid(y), y)
        o_ref[...] = y.astype(o_ref.dtype)


def matmul_pallas(a, b, scale=None, shift=None, activation="none",
                  out_dtype=jnp.bfloat16, sigmoid_mask=None):
    """a: (M, K)  b: (K, N)  scale/shift: (N,) -> (M, N) with fused epilogue."""
    M, K = a.shape
    _, N = b.shape
    if scale is None:
        scale = jnp.ones((N,), jnp.float32)
    if shift is None:
        shift = jnp.zeros((N,), jnp.float32)

    # tile selection: bf16 operands, tn widened to 256 for the 256-wide MXUs,
    # tk up to 512; VMEM use stays ~1.5 MiB (safe on v5e/v6e/v7x).
    Mp = round_up(M, SUB)
    if Mp > 256:
        tm = 256
        Mp = round_up(Mp, tm)
    else:
        tm = Mp
    Np = round_up(N, 128)
    tn = 256 if Np % 256 == 0 else 128
    Kp = round_up(K, 128)
    if Kp % 512 == 0:
        tk = 512
    elif Kp % 256 == 0:
        tk = 256
    else:
        tk = 128

    ap = jnp.pad(a.astype(jnp.bfloat16), ((0, Mp - M), (0, Kp - K)))
    bp = jnp.pad(b.astype(jnp.bfloat16), ((0, Kp - K), (0, Np - N)))
    sp = jnp.pad(scale.astype(jnp.float32).reshape(1, N), ((0, 0), (0, Np - N)))
    hp = jnp.pad(shift.astype(jnp.float32).reshape(1, N), ((0, 0), (0, Np - N)))

    inputs = [ap, bp, sp, hp]
    in_specs = [
        pl.BlockSpec((tm, tk), lambda i, j, k: (i, k)),
        pl.BlockSpec((tk, tn), lambda i, j, k: (k, j)),
        pl.BlockSpec((1, tn), lambda i, j, k: (0, j)),
        pl.BlockSpec((1, tn), lambda i, j, k: (0, j)),
    ]
    if activation == "sigmoid_mask":
        mk = jnp.pad(sigmoid_mask.astype(jnp.float32).reshape(1, N),
                     ((0, 0), (0, Np - N)))
        inputs.append(mk)
        in_specs.append(pl.BlockSpec((1, tn), lambda i, j, k: (0, j)))

    grid = (Mp // tm, Np // tn, Kp // tk)
    out = pl.pallas_call(
        functools.partial(_matmul_kernel, activation=activation),
        out_shape=jax.ShapeDtypeStruct((Mp, Np), out_dtype),
        grid_spec=pltpu.PrefetchScalarGridSpec(
            num_scalar_prefetch=0,
            grid=grid,
            in_specs=in_specs,
            out_specs=pl.BlockSpec((tm, tn), lambda i, j, k: (i, j)),
            scratch_shapes=[pltpu.VMEM((tm, tn), jnp.float32)],
        ),
        compiler_params=pltpu.CompilerParams(
            dimension_semantics=("parallel", "parallel", "arbitrary")),
    )(*inputs)
    return out[:M, :N]


def _maxpool_kernel(x_ref, o_ref):
    t = pl.program_id(1)

    @pl.when(t == 0)
    def _():
        o_ref[...] = x_ref[0]

    @pl.when(t > 0)
    def _():
        o_ref[...] = jnp.maximum(o_ref[...], x_ref[0])


def _add_relu_kernel(a_ref, b_ref, o_ref):
    s = a_ref[...].astype(jnp.float32) + b_ref[...].astype(jnp.float32)
    o_ref[...] = jnp.maximum(s, 0.0).astype(o_ref.dtype)


def _l2norm_kernel(x_ref, w_ref, o_ref):
    x = x_ref[...].astype(jnp.float32)
    norm = jnp.sqrt(jnp.sum(x * x, axis=1, keepdims=True)) + 1e-10
    inv = pl.reciprocal(norm, approx=True)
    o_ref[...] = (w_ref[...] * (x * inv)).astype(o_ref.dtype)


# ------------------------------------------------------------------
# Conv / pooling / norm helpers built on the kernels (NHWC layout)
# ------------------------------------------------------------------
# TODO(synk): the 3x3-conv im2col still materializes a 9x patch expansion in
# HBM (in bf16); folding the tap loop into the GEMM K-axis index_map is a
# further bandwidth optimization not done here.
def im2col(x, kh, kw, stride, pad, dilation=1):
    N, H, W, C = x.shape
    Ho = (H + 2 * pad - dilation * (kh - 1) - 1) // stride + 1
    Wo = (W + 2 * pad - dilation * (kw - 1) - 1) // stride + 1
    xp = jnp.pad(x, ((0, 0), (pad, pad), (pad, pad), (0, 0)))
    cols = []
    for i in range(kh):
        for j in range(kw):
            hi, wi = i * dilation, j * dilation
            cols.append(xp[:, hi:hi + stride * Ho:stride, wi:wi + stride * Wo:stride, :])
    patches = jnp.stack(cols, axis=3)                    # (N, Ho, Wo, kk, C)
    return patches.reshape(N * Ho * Wo, kh * kw * C), Ho, Wo


def conv2d(x, w, stride=1, pad=0, dilation=1, scale=None, shift=None,
           activation="none", out_dtype=jnp.bfloat16, sigmoid_mask=None):
    """x: NHWC, w: PyTorch layout (Cout, Cin, kh, kw)."""
    N = x.shape[0]
    Cout, Cin, kh, kw = w.shape
    patches, Ho, Wo = im2col(x.astype(jnp.bfloat16), kh, kw, stride, pad, dilation)
    bmat = w.transpose(2, 3, 1, 0).reshape(kh * kw * Cin, Cout)   # (kk*Cin, Cout)
    y = matmul_pallas(patches, bmat, scale, shift, activation, out_dtype,
                      sigmoid_mask=sigmoid_mask)
    return y.reshape(N, Ho, Wo, Cout)


def maxpool2d(x, k=3, stride=2, pad=1):
    N, H, W, C = x.shape
    Ho = (H + 2 * pad - k) // stride + 1
    Wo = (W + 2 * pad - k) // stride + 1
    xp = jnp.pad(x, ((0, 0), (pad, pad), (pad, pad), (0, 0)),
                 constant_values=-jnp.inf)
    cols = []
    for i in range(k):
        for j in range(k):
            cols.append(xp[:, i:i + stride * Ho:stride, j:j + stride * Wo:stride, :])
    kk = k * k
    M = N * Ho * Wo
    patches = jnp.stack(cols, axis=0).reshape(kk, M, C)
    Mp, Cp = round_up(M, SUB), round_up(C, 128)
    if Mp > 256:
        tr = 256
        Mp = round_up(Mp, tr)
    else:
        tr = Mp
    pp = jnp.pad(patches, ((0, 0), (0, Mp - M), (0, Cp - C)),
                 constant_values=-jnp.inf)
    out = pl.pallas_call(
        _maxpool_kernel,
        out_shape=jax.ShapeDtypeStruct((Mp, Cp), x.dtype),
        grid_spec=pltpu.PrefetchScalarGridSpec(
            num_scalar_prefetch=0,
            grid=(Mp // tr, kk),
            in_specs=[pl.BlockSpec((1, tr, Cp), lambda m, t: (t, m, 0))],
            out_specs=pl.BlockSpec((tr, Cp), lambda m, t: (m, 0)),
        ),
        compiler_params=pltpu.CompilerParams(
            dimension_semantics=("parallel", "arbitrary")),
    )(pp)
    return out[:M, :C].reshape(N, Ho, Wo, C)


def add_relu(a, b):
    shape, dtype = a.shape, a.dtype
    T = a.size
    R = (T + LANES - 1) // LANES
    if R <= 256:
        tr = round_up(R, SUB)
        Rp = tr
    else:
        tr = 256
        Rp = round_up(R, tr)
    Tp = Rp * LANES
    af = jnp.pad(a.reshape(-1), (0, Tp - T)).reshape(Rp, LANES)
    bf = jnp.pad(b.reshape(-1), (0, Tp - T)).reshape(Rp, LANES)
    out = pl.pallas_call(
        _add_relu_kernel,
        out_shape=jax.ShapeDtypeStruct((Rp, LANES), dtype),
        grid_spec=pltpu.PrefetchScalarGridSpec(
            num_scalar_prefetch=0,
            grid=(Rp // tr,),
            in_specs=[pl.BlockSpec((tr, LANES), lambda i: (i, 0)),
                      pl.BlockSpec((tr, LANES), lambda i: (i, 0))],
            out_specs=pl.BlockSpec((tr, LANES), lambda i: (i, 0)),
        ),
        compiler_params=pltpu.CompilerParams(dimension_semantics=("parallel",)),
    )(af, bf)
    return out.reshape(-1)[:T].reshape(shape)


def l2norm(x, weight):
    N, H, W, C = x.shape
    M = N * H * W
    a = x.reshape(M, C)
    Mp, Cp = round_up(M, SUB), round_up(C, 128)
    if Mp > 256:
        tr = 256
        Mp = round_up(Mp, tr)
    else:
        tr = Mp
    ap = jnp.pad(a, ((0, Mp - M), (0, Cp - C)))
    wp = jnp.pad(weight.astype(jnp.float32).reshape(1, C), ((0, 0), (0, Cp - C)))
    out = pl.pallas_call(
        _l2norm_kernel,
        out_shape=jax.ShapeDtypeStruct((Mp, Cp), x.dtype),
        grid_spec=pltpu.PrefetchScalarGridSpec(
            num_scalar_prefetch=0,
            grid=(Mp // tr,),
            in_specs=[pl.BlockSpec((tr, Cp), lambda i: (i, 0)),
                      pl.BlockSpec((1, Cp), lambda i: (0, 0))],
            out_specs=pl.BlockSpec((tr, Cp), lambda i: (i, 0)),
        ),
        compiler_params=pltpu.CompilerParams(dimension_semantics=("parallel",)),
    )(ap, wp)
    return out[:M, :C].reshape(N, H, W, C)


# ------------------------------------------------------------------
# BatchNorm folding (inference semantics)
# ------------------------------------------------------------------
# TODO(synk): BatchNorm is applied in inference mode using the freshly
# initialized running stats (mean=0, var=1, gamma=1, beta=0); train-mode
# per-batch statistics are not reproduced.
def bn_fold(c):
    scale = jnp.full((c,), 1.0 / math.sqrt(1.0 + BN_EPS), jnp.float32)
    shift = jnp.zeros((c,), jnp.float32)
    return scale, shift


# ------------------------------------------------------------------
# ConvTranspose2d heads (NHWC)
# ------------------------------------------------------------------
def conv_transpose_s4(x, w, bias):
    """ConvTranspose2d kernel=4, stride=4, pad=0 (non-overlapping) as one GEMM."""
    N, H, W, Cin = x.shape
    Cout = w.shape[1]
    a = x.reshape(N * H * W, Cin)
    bmat = w.reshape(Cin, Cout * 16)                     # cols ordered (co, kh, kw)
    shift = jnp.repeat(bias, 16)
    y = matmul_pallas(a, bmat, None, shift, "none")
    y = y.reshape(N, H, W, Cout, 4, 4).transpose(0, 1, 4, 2, 5, 3)
    return y.reshape(N, 4 * H, 4 * W, Cout)


def conv_transpose_p3(x, w, bias):
    """ConvTranspose2d kernel=4, stride=2, pad=1 via 4-phase sub-pixel decomposition.

    Each output phase (a,b) in {0,1}^2 is a 2x2 conv of the original-resolution
    input, so no MACs are spent on inserted zeros.
    """
    N, H, W, Cin = x.shape
    Cout = w.shape[1]
    wt = w.transpose(1, 0, 2, 3)                         # (Cout, Cin, 4, 4)
    taps = [[3, 1], [2, 0]]                              # kernel taps per phase
    pads = [(1, 0), (0, 1)]                              # asymmetric spatial pad
    phases = []
    for a in range(2):
        row = []
        for b in range(2):
            wab = wt[:, :, taps[a], :][:, :, :, taps[b]]   # (Cout, Cin, 2, 2)
            xp = jnp.pad(x, ((0, 0), pads[a], pads[b], (0, 0)))
            row.append(conv2d(xp, wab, 1, 0, 1, None, bias, "none"))
        phases.append(row)
    y = jnp.stack([jnp.stack(r, axis=0) for r in phases], axis=0)  # (2,2,N,H,W,C)
    y = y.transpose(2, 3, 0, 4, 1, 5).reshape(N, 2 * H, 2 * W, Cout)
    return y


# ------------------------------------------------------------------
# Parameter construction (deterministic, mirrors the PyTorch inits)
# ------------------------------------------------------------------
def build_params(key):
    ks = iter(jax.random.split(key, 256))

    def nk():
        return next(ks)

    def conv_w(cout, cin, kh, kw):
        n = kh * kw * cout
        return jax.random.normal(nk(), (cout, cin, kh, kw), jnp.float32) * math.sqrt(2.0 / n)

    def xavier(shape, fan_in, fan_out):
        std = math.sqrt(2.0 / (fan_in + fan_out))
        return jax.random.normal(nk(), shape, jnp.float32) * std

    p = {}
    p['conv1'] = conv_w(64, 3, 7, 7)

    cfg = [(64, 3, 1, 1), (128, 4, 2, 1), (256, 6, 2, 1), (512, 3, 1, 2)]  # ResNet-50
    inplanes = 64
    layers = []
    for planes, blocks, stride, dilate in cfg:
        blist = []
        for bi in range(blocks):
            s = stride if bi == 0 else 1
            blk = {
                'conv1': conv_w(planes, inplanes, 1, 1),
                'conv2': conv_w(planes, planes, 3, 3),
                'conv3': conv_w(planes * 4, planes, 1, 1),
                'stride': s,
                'dilate': dilate,
            }
            if bi == 0 and (stride != 1 or inplanes != planes * 4):
                blk['down'] = conv_w(planes * 4, inplanes, 1, 1)
            inplanes = planes * 4
            blist.append(blk)
        layers.append(blist)
    p['layers'] = layers

    # ConvTranspose2d weights have layout (Cin, Cout, kh, kw)
    p['p3_w'] = xavier((512, 256, 4, 4), 256 * 16, 512 * 16)
    p['p3_b'] = jnp.zeros((256,), jnp.float32)
    p['p4_w'] = xavier((1024, 256, 4, 4), 256 * 16, 1024 * 16)
    p['p4_b'] = jnp.zeros((256,), jnp.float32)
    p['p5_w'] = xavier((2048, 256, 4, 4), 256 * 16, 2048 * 16)
    p['p5_b'] = jnp.zeros((256,), jnp.float32)
    p['p3_l2'] = jnp.full((256,), 10.0, jnp.float32)
    p['p4_l2'] = jnp.full((256,), 10.0, jnp.float32)
    p['p5_l2'] = jnp.full((256,), 10.0, jnp.float32)
    p['feat_w'] = xavier((256, 768, 3, 3), 768 * 9, 256 * 9)
    p['pos_w'] = xavier((1, 256, 1, 1), 256, 1)
    p['pos_b'] = jnp.full((1,), -math.log(0.99 / 0.01), jnp.float32)
    p['reg_w'] = xavier((1, 256, 1, 1), 256, 1)
    p['reg_b'] = jnp.zeros((1,), jnp.float32)
    p['off_w'] = xavier((2, 256, 1, 1), 256, 2)
    p['off_b'] = jnp.zeros((2,), jnp.float32)
    return p


# ------------------------------------------------------------------
# Forward pass (activations NHWC bf16; heads emitted in f32 NCHW)
# ------------------------------------------------------------------
def bottleneck(x, blk):
    s, d = blk['stride'], blk['dilate']
    planes = blk['conv1'].shape[0]
    sc1, sh1 = bn_fold(planes)
    sc2, sh2 = bn_fold(planes)
    sc3, sh3 = bn_fold(planes * 4)
    out = conv2d(x, blk['conv1'], 1, 0, 1, sc1, sh1, "relu")
    out = conv2d(out, blk['conv2'], s, d, d, sc2, sh2, "relu")
    out = conv2d(out, blk['conv3'], 1, 0, 1, sc3, sh3, "none")
    if 'down' in blk:
        scd, shd = bn_fold(planes * 4)
        residual = conv2d(x, blk['down'], s, 0, 1, scd, shd, "none")
    else:
        residual = x
    return add_relu(out, residual)


def cspnet_forward(p, x_nchw):
    x = x_nchw.transpose(0, 2, 3, 1).astype(jnp.bfloat16)     # NHWC
    sc, sh = bn_fold(64)
    x = conv2d(x, p['conv1'], 2, 3, 1, sc, sh, "relu")
    x = maxpool2d(x, 3, 2, 1)
    for blk in p['layers'][0]:
        x = bottleneck(x, blk)
    for blk in p['layers'][1]:
        x = bottleneck(x, blk)
    p3 = l2norm(conv_transpose_p3(x, p['p3_w'], p['p3_b']), p['p3_l2'])
    for blk in p['layers'][2]:
        x = bottleneck(x, blk)
    p4 = l2norm(conv_transpose_s4(x, p['p4_w'], p['p4_b']), p['p4_l2'])
    for blk in p['layers'][3]:
        x = bottleneck(x, blk)
    p5 = l2norm(conv_transpose_s4(x, p['p5_w'], p['p5_b']), p['p5_l2'])
    cat = jnp.concatenate([p3, p4, p5], axis=-1)               # (N, H, W, 768)
    scf, shf = bn_fold(256)
    feat = conv2d(cat, p['feat_w'], 1, 1, 1, scf, shf, "relu")
    # Fused 1x1 heads: [pos(1), reg(1), off(2)] in one GEMM; sigmoid on col 0
    # selected via a per-column mask (avoids pl.program_id in the epilogue).
    head_w = jnp.concatenate([p['pos_w'], p['reg_w'], p['off_w']], axis=0)
    head_b = jnp.concatenate([p['pos_b'], p['reg_b'], p['off_b']], axis=0)
    sig_mask = jnp.array([1.0, 0.0, 0.0, 0.0], jnp.float32)
    head = conv2d(feat, head_w, 1, 0, 1, None, head_b, "sigmoid_mask",
                  out_dtype=jnp.float32, sigmoid_mask=sig_mask)
    x_cls = head[..., 0:1].transpose(0, 3, 1, 2)
    x_reg = head[..., 1:2].transpose(0, 3, 1, 2)
    x_off = head[..., 2:4].transpose(0, 3, 1, 2)
    return x_cls, x_reg, x_off


if __name__ == "__main__":
    key = jax.random.PRNGKey(0)
    pkey, xkey = jax.random.split(key)
    params = build_params(pkey)
    x = jax.random.normal(xkey, (1, 3, 32, 32), jnp.float32)

    x_cls, x_reg, x_off = cspnet_forward(params, x)
    jax.block_until_ready((x_cls, x_reg, x_off))

    assert x_cls.shape == (1, 1, 8, 8)
    assert x_reg.shape == (1, 1, 8, 8)
    assert x_off.shape == (1, 2, 8, 8)
    assert bool(jnp.all(jnp.isfinite(x_cls)) & jnp.all(jnp.isfinite(x_reg)) & jnp.all(jnp.isfinite(x_off)))
    print("KERNEL_OK")
</pallas_src>

<mosaic_0001>
module attributes {stable_mosaic.version = 11 : i64} {
  func.func @_matmul_kernel(%arg0: i32, %arg1: i32, %arg2: i32, %arg3: memref<256x256xbf16, #tpu.memory_space<vmem>>, %arg4: memref<256x128xbf16, #tpu.memory_space<vmem>>, %arg5: memref<1x128xf32, #tpu.memory_space<vmem>>, %arg6: memref<1x128xf32, #tpu.memory_space<vmem>>, %arg7: memref<256x128xbf16, #tpu.memory_space<vmem>>, %arg8: memref<256x128xf32, #tpu.memory_space<vmem>>) attributes {dimension_semantics = [#tpu.dimension_semantics<parallel>, #tpu.dimension_semantics<parallel>, #tpu.dimension_semantics<arbitrary>], iteration_bounds = array<i64: 1, 1, 1>, scalar_prefetch = 0 : i64, scratch_operands = 1 : i64, tpu.core_type = #tpu.core_type<tc>, window_params = [{transform_indices = @transform_0, window_bounds = array<i64: 256, 256>}, {transform_indices = @transform_1, window_bounds = array<i64: 256, 128>}, {transform_indices = @transform_2, window_bounds = array<i64: 1, 128>}, {transform_indices = @transform_3, window_bounds = array<i64: 1, 128>}, {transform_indices = @transform_4, window_bounds = array<i64: 256, 128>}]} {
    %c0_i32 = arith.constant 0 : i32
    %0 = arith.cmpi eq, %arg2, %c0_i32 : i32
    %1 = arith.extui %0 : i1 to i32
    %c0_i32_0 = arith.constant 0 : i32
    %2 = arith.cmpi ne, %1, %c0_i32_0 : i32
    scf.if %2 {
      %cst_10 = arith.constant 0.000000e+00 : f32
      %12 = vector.broadcast %cst_10 : f32 to vector<256x128xf32>
      %c0_11 = arith.constant 0 : index
      %c0_12 = arith.constant 0 : index
      %13 = vector.load %arg8[%c0_11, %c0_12] : memref<256x128xf32, #tpu.memory_space<vmem>>, vector<256x128xf32>
      tpu.vector_store %arg8[%c0_11, %c0_12], %12 {strides = array<i32>} : memref<256x128xf32, #tpu.memory_space<vmem>>, vector<256x128xf32>,
    } else {
    }
    %c0 = arith.constant 0 : index
    %c0_1 = arith.constant 0 : index
    %3 = vector.load %arg8[%c0, %c0_1] : memref<256x128xf32, #tpu.memory_space<vmem>>, vector<256x128xf32>
    %c0_2 = arith.constant 0 : index
    %c0_3 = arith.constant 0 : index
    %4 = vector.load %arg3[%c0_2, %c0_3] : memref<256x256xbf16, #tpu.memory_space<vmem>>, vector<256x256xbf16>
    %c0_4 = arith.constant 0 : index
    %c0_5 = arith.constant 0 : index
    %5 = vector.load %arg4[%c0_4, %c0_5] : memref<256x128xbf16, #tpu.memory_space<vmem>>, vector<256x128xbf16>
    %cst = arith.constant dense<0.000000e+00> : vector<256x128xf32>
    %6 = tpu.matmul %4, %5, %cst {dimension_numbers = #tpu.dot_dimension_numbers<[1], [0], [0], [1], [0, 0, 1, 1], [], []>} : vector<256x256xbf16>, vector<256x128xbf16>, vector<256x128xf32> -> vector<256x128xf32>
    %7 = arith.addf %3, %6 : vector<256x128xf32>
    %c0_6 = arith.constant 0 : index
    %c0_7 = arith.constant 0 : index
    %8 = vector.load %arg8[%c0_6, %c0_7] : memref<256x128xf32, #tpu.memory_space<vmem>>, vector<256x128xf32>
    tpu.vector_store %arg8[%c0_6, %c0_7], %7 {strides = array<i32>} : memref<256x128xf32, #tpu.memory_space<vmem>>, vector<256x128xf32>,
    %c0_i32_8 = arith.constant 0 : i32
    %9 = arith.cmpi eq, %arg2, %c0_i32_8 : i32
    %10 = arith.extui %9 : i1 to i32
    %c0_i32_9 = arith.constant 0 : i32
    %11 = arith.cmpi ne, %10, %c0_i32_9 : i32
    scf.if %11 {
      %c0_10 = arith.constant 0 : index
      %c0_11 = arith.constant 0 : index
      %12 = vector.load %arg8[%c0_10, %c0_11] : memref<256x128xf32, #tpu.memory_space<vmem>>, vector<256x128xf32>
      %c0_12 = arith.constant 0 : index
      %c0_13 = arith.constant 0 : index
      %13 = vector.load %arg5[%c0_12, %c0_13] : memref<1x128xf32, #tpu.memory_space<vmem>>, vector<1x128xf32>
      %14 = vector.broadcast %13 : vector<1x128xf32> to vector<256x128xf32>
      %15 = arith.mulf %12, %14 : vector<256x128xf32>
      %c0_14 = arith.constant 0 : index
      %c0_15 = arith.constant 0 : index
      %16 = vector.load %arg6[%c0_14, %c0_15] : memref<1x128xf32, #tpu.memory_space<vmem>>, vector<1x128xf32>
      %17 = vector.broadcast %16 : vector<1x128xf32> to vector<256x128xf32>
      %18 = arith.addf %15, %17 : vector<256x128xf32>
      %cst_16 = arith.constant 0.000000e+00 : f32
      %19 = vector.broadcast %cst_16 : f32 to vector<256x128xf32>
      %20 = arith.maximumf %18, %19 : vector<256x128xf32>
      %21 = arith.truncf %20 : vector<256x128xf32> to vector<256x128xbf16>
      %c0_17 = arith.constant 0 : index
      %c0_18 = arith.constant 0 : index
      %22 = vector.load %arg7[%c0_17, %c0_18] : memref<256x128xbf16, #tpu.memory_space<vmem>>, vector<256x128xbf16>
      tpu.vector_store %arg7[%c0_17, %c0_18], %21 {strides = array<i32>} : memref<256x128xbf16, #tpu.memory_space<vmem>>, vector<256x128xbf16>,
    } else {
    }
    return
  }
  func.func @transform_0(%arg0: i32, %arg1: i32, %arg2: i32) -> (i32, i32) {
    %c0_i32 = arith.constant 0 : i32
    return %arg0, %arg2 : i32, i32
  }
  func.func @transform_1(%arg0: i32, %arg1: i32, %arg2: i32) -> (i32, i32) {
    %c0_i32 = arith.constant 0 : i32
    return %arg2, %arg1 : i32, i32
  }
  func.func @transform_2(%arg0: i32, %arg1: i32, %arg2: i32) -> (i32, i32) {
    %c0_i32 = arith.constant 0 : i32
    %c0_i32_0 = arith.constant 0 : i32
    return %c0_i32, %arg1 : i32, i32
  }
  func.func @transform_3(%arg0: i32, %arg1: i32, %arg2: i32) -> (i32, i32) {
    %c0_i32 = arith.constant 0 : i32
    %c0_i32_0 = arith.constant 0 : i32
    return %c0_i32, %arg1 : i32, i32
  }
  func.func @transform_4(%arg0: i32, %arg1: i32, %arg2: i32) -> (i32, i32) {
    %c0_i32 = arith.constant 0 : i32
    return %arg0, %arg1 : i32, i32
  }
}

</mosaic_0001>

<llo_original>
// kernel: tpu_custom_call.1
$region0: #{tpu_custom_call.1}
  #allocation0 [shape = 'u32[]', space=smem, size = 0x4, offset = 0x4, fixed_abs, tag = 'smem constant byte address 0x4 - core index']
  #allocation1 [shape = 'u32[144,128]{1,0:T(1,128)}', space=vmem, size = 0x12000, scoped, tag = 'internal scratch']
  #allocation2 [shape = 'f32[256,128]{1,0:T(8,128)}', space=vmem, size = 0x20000, scoped, tag = 'scratch operand']
  %s0 = inlined_call_operand.hbm [shape: bf16[256,256], index: 0, kind: input, shape index: {}]
  %s1 = inlined_call_operand.hbm [shape: bf16[256,128], index: 1, kind: input, shape index: {}]
  %s2 = inlined_call_operand.vmem [shape: f32[1,128], index: 2, kind: input, shape index: {}]
  %s3 = inlined_call_operand.vmem [shape: f32[1,128], index: 3, kind: input, shape index: {}]
  %s4 = inlined_call_operand.hbm [shape: bf16[256,128], index: 4, kind: output, shape index: {}]
  %s5 = sld [smem:[#allocation0]]
  $region42: #{tpu_custom_call.1} parent=0
    _
  %s7 = ssub.s32 1, %s5
  %s8 = scalar_select 0, %s7, %s5
  $region1: #{tpu_custom_call.1} parent=0
    #allocation3 [shape = 'u8[131072]{0}', space=vmem, size = 0x20000, scoped, tag = 'input window, operand 0, single buffered']
    #allocation4 [shape = 's32[1]{0}', space=sflag, size = 0x4, scoped, tag = 'scoped memory for tpu_custom_call.1']
    #allocation5 [shape = 's32[1]{0}', space=sflag, size = 0x4, scoped, tag = 'scoped memory for tpu_custom_call.1']
    #allocation6 [shape = 'u8[65536]{0}', space=vmem, size = 0x10000, scoped, tag = 'input window, operand 1, single buffered']
    #allocation7 [shape = 's32[1]{0}', space=sflag, size = 0x4, scoped, tag = 'scoped memory for tpu_custom_call.1']
    #allocation8 [shape = 'u8[65536]{0}', space=vmem, size = 0x10000, scoped, tag = 'output window, operand 0, single buffered']
    %9 = vsyncpa [#allocation4], 0
    %10 = vsyncpa [#allocation7], 0
    %11 = vsyncpa [#allocation5], 0
    // Predicated region
    $region2: #{tpu_custom_call.1} parent=1 // pred_check
      _
    $region3: #{tpu_custom_call.1} parent=1 // pred_check_branch
      %13 = sbr.rel (0) target = $region5
    $region4: #{tpu_custom_call.1} parent=1 // pred_region
      %s15 = ssub.s32 4096, 4096
      %16 = vsyncadd [#allocation4], %s15
      %s17 = sshll.u32 [#allocation3], 4
      %s18 = int_to_ptr.vmem [resolvable:$true] %s17
      %23 = dma.hbm_to_vmem [thread:$0]  %s0, 4096, %s18, [#allocation4], 128, 128, 8
    $region5: #{tpu_custom_call.1} parent=1 // pred_fallthru
      _
    // Predicated region
    $region6: #{tpu_custom_call.1} parent=1 // pred_check
      _
    $region7: #{tpu_custom_call.1} parent=1 // pred_check_branch
      %25 = sbr.rel (0) target = $region9
    $region8: #{tpu_custom_call.1} parent=1 // pred_region
      %s27 = ssub.s32 2048, 2048
      %28 = vsyncadd [#allocation7], %s27
      %s29 = sshll.u32 [#allocation6], 4
      %s30 = int_to_ptr.vmem [resolvable:$true] %s29
      %35 = dma.hbm_to_vmem [thread:$0]  %s1, 2048, %s30, [#allocation7], 64, 64, 4
    $region9: #{tpu_custom_call.1} parent=1 // pred_fallthru
      _
    // Predicated region
    $region10: #{tpu_custom_call.1} parent=1 // pred_check
      _
    $region11: #{tpu_custom_call.1} parent=1 // pred_check_branch
      %37 = sbr.rel (0) target = $region13
    $region12: #{tpu_custom_call.1} parent=1 // pred_region
      _
    $region13: #{tpu_custom_call.1} parent=1 // pred_fallthru
      _
    // Predicated region
    $region14: #{tpu_custom_call.1} parent=1 // pred_check
      _
    $region15: #{tpu_custom_call.1} parent=1 // pred_check_branch
      %39 = sbr.rel (0) target = $region17
    $region16: #{tpu_custom_call.1} parent=1 // pred_region
      _
    $region17: #{tpu_custom_call.1} parent=1 // pred_fallthru
      _
    // Predicated region
    $region18: #{tpu_custom_call.1} parent=1 // pred_check
      _
    $region19: #{tpu_custom_call.1} parent=1 // pred_check_branch
      %41 = sbr.rel (0) target = $region21
    $region20: #{tpu_custom_call.1} parent=1 // pred_region
      %42 = dma.done [#allocation4], 4096
    $region21: #{tpu_custom_call.1} parent=1 // pred_fallthru
      _
    // Predicated region
    $region22: #{tpu_custom_call.1} parent=1 // pred_check
      _
    $region23: #{tpu_custom_call.1} parent=1 // pred_check_branch
      %44 = sbr.rel (0) target = $region25
    $region24: #{tpu_custom_call.1} parent=1 // pred_region
      %45 = dma.done [#allocation7], 2048
    $region25: #{tpu_custom_call.1} parent=1 // pred_fallthru
      _
    %p47 = scmp.eq.s32.totalorder 0, 0
    // Predicated region
    $region26: #{tpu_custom_call.1} parent=1 // pred_check
      %p48 = pneg %p47
    $region27: #{tpu_custom_call.1} parent=1 // pred_check_branch
      %50 = sbr.rel (%p48) target = $region29
    $region28: #{tpu_custom_call.1} parent=1 // pred_region
      %51 = vst [vmem:[#allocation2] sm:$0xff] 0.0
      %52 = vst [vmem:[#allocation2 + $0x8] sm:$0xff] 0.0
      %53 = vst [vmem:[#allocation2 + $0x10] sm:$0xff] 0.0
      %54 = vst [vmem:[#allocation2 + $0x18] sm:$0xff] 0.0
      %55 = vst [vmem:[#allocation2 + $0x20] sm:$0xff] 0.0
      %56 = vst [vmem:[#allocation2 + $0x28] sm:$0xff] 0.0
      %57 = vst [vmem:[#allocation2 + $0x30] sm:$0xff] 0.0
      %58 = vst [vmem:[#allocation2 + $0x38] sm:$0xff] 0.0
      %59 = vst [vmem:[#allocation2 + $0x40] sm:$0xff] 0.0
      %60 = vst [vmem:[#allocation2 + $0x48] sm:$0xff] 0.0
      %61 = vst [vmem:[#allocation2 + $0x50] sm:$0xff] 0.0
      %62 = vst [vmem:[#allocation2 + $0x58] sm:$0xff] 0.0
      %63 = vst [vmem:[#allocation2 + $0x60] sm:$0xff] 0.0
      %64 = vst [vmem:[#allocation2 + $0x68] sm:$0xff] 0.0
      %65 = vst [vmem:[#allocation2 + $0x70] sm:$0xff] 0.0
      %66 = vst [vmem:[#allocation2 + $0x78] sm:$0xff] 0.0
      %67 = vst [vmem:[#allocation2 + $0x80] sm:$0xff] 0.0
      %68 = vst [vmem:[#allocation2 + $0x88] sm:$0xff] 0.0
      %69 = vst [vmem:[#allocation2 + $0x90] sm:$0xff] 0.0
      %70 = vst [vmem:[#allocation2 + $0x98] sm:$0xff] 0.0
      %71 = vst [vmem:[#allocation2 + $0xa0] sm:$0xff] 0.0
      %72 = vst [vmem:[#allocation2 + $0xa8] sm:$0xff] 0.0
      %73 = vst [vmem:[#allocation2 + $0xb0] sm:$0xff] 0.0
      %74 = vst [vmem:[#allocation2 + $0xb8] sm:$0xff] 0.0
      %75 = vst [vmem:[#allocation2 + $0xc0] sm:$0xff] 0.0
      %76 = vst [vmem:[#allocation2 + $0xc8] sm:$0xff] 0.0
      %77 = vst [vmem:[#allocation2 + $0xd0] sm:$0xff] 0.0
      %78 = vst [vmem:[#allocation2 + $0xd8] sm:$0xff] 0.0
      %79 = vst [vmem:[#allocation2 + $0xe0] sm:$0xff] 0.0
      %80 = vst [vmem:[#allocation2 + $0xe8] sm:$0xff] 0.0
      %81 = vst [vmem:[#allocation2 + $0xf0] sm:$0xff] 0.0
      %82 = vst [vmem:[#allocation2 + $0xf8] sm:$0xff] 0.0
    $region29: #{tpu_custom_call.1} parent=1 // pred_fallthru
      _
    %v83 = vld [vmem:[#allocation2] sm:$0xff]
    %v84 = vld [vmem:[#allocation2 + $0x8] sm:$0xff]
    %v85 = vld [vmem:[#allocation2 + $0x10] sm:$0xff]
    %v86 = vld [vmem:[#allocation2 + $0x18] sm:$0xff]
    %v87 = vld [vmem:[#allocation2 + $0x20] sm:$0xff]
    %v88 = vld [vmem:[#allocation2 + $0x28] sm:$0xff]
    %v89 = vld [vmem:[#allocation2 + $0x30] sm:$0xff]
    %v90 = vld [vmem:[#allocation2 + $0x38] sm:$0xff]
    %v91 = vld [vmem:[#allocation2 + $0x40] sm:$0xff]
    %v92 = vld [vmem:[#allocation2 + $0x48] sm:$0xff]
    %v93 = vld [vmem:[#allocation2 + $0x50] sm:$0xff]
    %v94 = vld [vmem:[#allocation2 + $0x58] sm:$0xff]
    %v95 = vld [vmem:[#allocation2 + $0x60] sm:$0xff]
    %v96 = vld [vmem:[#allocation2 + $0x68] sm:$0xff]
    %v97 = vld [vmem:[#allocation2 + $0x70] sm:$0xff]
    %v98 = vld [vmem:[#allocation2 + $0x78] sm:$0xff]
    %v99 = vld [vmem:[#allocation2 + $0x80] sm:$0xff]
    %v100 = vld [vmem:[#allocation2 + $0x88] sm:$0xff]
    %v101 = vld [vmem:[#allocation2 + $0x90] sm:$0xff]
    %v102 = vld [vmem:[#allocation2 + $0x98] sm:$0xff]
    %v103 = vld [vmem:[#allocation2 + $0xa0] sm:$0xff]
    %v104 = vld [vmem:[#allocation2 + $0xa8] sm:$0xff]
    %v105 = vld [vmem:[#allocation2 + $0xb0] sm:$0xff]
    %v106 = vld [vmem:[#allocation2 + $0xb8] sm:$0xff]
    %v107 = vld [vmem:[#allocation2 + $0xc0] sm:$0xff]
    %v108 = vld [vmem:[#allocation2 + $0xc8] sm:$0xff]
    %v109 = vld [vmem:[#allocation2 + $0xd0] sm:$0xff]
    %v110 = vld [vmem:[#allocation2 + $0xd8] sm:$0xff]
    %v111 = vld [vmem:[#allocation2 + $0xe0] sm:$0xff]
    %v112 = vld [vmem:[#allocation2 + $0xe8] sm:$0xff]
    %v113 = vld [vmem:[#allocation2 + $0xf0] sm:$0xff]
    %v114 = vld [vmem:[#allocation2 + $0xf8] sm:$0xff]
    %v115 = vld [vmem:[#allocation3] sm:$0xff]
    %v116 = vld [vmem:[#allocation3 + $0x8] sm:$0xff]
    %v117 = vld [vmem:[#allocation3 + $0x10] sm:$0xff]
    %v118 = vld [vmem:[#allocation3 + $0x18] sm:$0xff]
    %v119 = vld [vmem:[#allocation3 + $0x20] sm:$0xff]
    %v120 = vld [vmem:[#allocation3 + $0x28] sm:$0xff]
    %v121 = vld [vmem:[#allocation3 + $0x30] sm:$0xff]
    %v122 = vld [vmem:[#allocation3 + $0x38] sm:$0xff]
    %v123 = vld [vmem:[#allocation3 + $0x40] sm:$0xff]
    %v124 = vld [vmem:[#allocation3 + $0x48] sm:$0xff]
    %v125 = vld [vmem:[#allocation3 + $0x50] sm:$0xff]
    %v126 = vld [vmem:[#allocation3 + $0x58] sm:$0xff]
    %v127 = vld [vmem:[#allocation3 + $0x60] sm:$0xff]
    %v128 = vld [vmem:[#allocation3 + $0x68] sm:$0xff]
    %v129 = vld [vmem:[#allocation3 + $0x70] sm:$0xff]
    %v130 = vld [vmem:[#allocation3 + $0x78] sm:$0xff]
    %v131 = vld [vmem:[#allocation3 + $0x80] sm:$0xff]
    %v132 = vld [vmem:[#allocation3 + $0x88] sm:$0xff]
    %v133 = vld [vmem:[#allocation3 + $0x90] sm:$0xff]
    %v134 = vld [vmem:[#allocation3 + $0x98] sm:$0xff]
    %v135 = vld [vmem:[#allocation3 + $0xa0] sm:$0xff]
    %v136 = vld [vmem:[#allocation3 + $0xa8] sm:$0xff]
    %v137 = vld [vmem:[#allocation3 + $0xb0] sm:$0xff]
    %v138 = vld [vmem:[#allocation3 + $0xb8] sm:$0xff]
    %v139 = vld [vmem:[#allocation3 + $0xc0] sm:$0xff]
    %v140 = vld [vmem:[#allocation3 + $0xc8] sm:$0xff]
    %v141 = vld [vmem:[#allocation3 + $0xd0] sm:$0xff]
    %v142 = vld [vmem:[#allocation3 + $0xd8] sm:$0xff]
    %v143 = vld [vmem:[#allocation3 + $0xe0] sm:$0xff]
    %v144 = vld [vmem:[#allocation3 + $0xe8] sm:$0xff]
    %v145 = vld [vmem:[#allocation3 + $0xf0] sm:$0xff]
    %v146 = vld [vmem:[#allocation3 + $0xf8] sm:$0xff]
    %v147 = vld [vmem:[#allocation6] sm:$0xf]
    %v148 = vld [vmem:[#allocation6 + $0x4] sm:$0xf]
    %v149 = vld [vmem:[#allocation6 + $0x8] sm:$0xf]
    %v150 = vld [vmem:[#allocation6 + $0xc] sm:$0xf]
    %v151 = vld [vmem:[#allocation6 + $0x10] sm:$0xf]
    %v152 = vld [vmem:[#allocation6 + $0x14] sm:$0xf]
    %v153 = vld [vmem:[#allocation6 + $0x18] sm:$0xf]
    %v154 = vld [vmem:[#allocation6 + $0x1c] sm:$0xf]
    %v155 = vld [vmem:[#allocation6 + $0x20] sm:$0xf]
    %v156 = vld [vmem:[#allocation6 + $0x24] sm:$0xf]
    %v157 = vld [vmem:[#allocation6 + $0x28] sm:$0xf]
    %v158 = vld [vmem:[#allocation6 + $0x2c] sm:$0xf]
    %v159 = vld [vmem:[#allocation6 + $0x30] sm:$0xf]
    %v160 = vld [vmem:[#allocation6 + $0x34] sm:$0xf]
    %v161 = vld [vmem:[#allocation6 + $0x38] sm:$0xf]
    %v162 = vld [vmem:[#allocation6 + $0x3c] sm:$0xf]
    %v163 = vld [vmem:[#allocation6 + $0x40] sm:$0xf]
    %v164 = vld [vmem:[#allocation6 + $0x44] sm:$0xf]
    %v165 = vld [vmem:[#allocation6 + $0x48] sm:$0xf]
    %v166 = vld [vmem:[#allocation6 + $0x4c] sm:$0xf]
    %v167 = vld [vmem:[#allocation6 + $0x50] sm:$0xf]
    %v168 = vld [vmem:[#allocation6 + $0x54] sm:$0xf]
    %v169 = vld [vmem:[#allocation6 + $0x58] sm:$0xf]
    %v170 = vld [vmem:[#allocation6 + $0x5c] sm:$0xf]
    %v171 = vld [vmem:[#allocation6 + $0x60] sm:$0xf]
    %v172 = vld [vmem:[#allocation6 + $0x64] sm:$0xf]
    %v173 = vld [vmem:[#allocation6 + $0x68] sm:$0xf]
    %v174 = vld [vmem:[#allocation6 + $0x6c] sm:$0xf]
    %v175 = vld [vmem:[#allocation6 + $0x70] sm:$0xf]
    %v176 = vld [vmem:[#allocation6 + $0x74] sm:$0xf]
    %v177 = vld [vmem:[#allocation6 + $0x78] sm:$0xf]
    %v178 = vld [vmem:[#allocation6 + $0x7c] sm:$0xf]
    %v211 = vunpack.c.l.b16 %v115
    %v212 = vunpack.c.h.b16 %v115
    %v213 = vunpack.c.l.b16 %v116
    %v214 = vunpack.c.h.b16 %v116
    %v215 = vunpack.c.l.b16 %v117
    %v216 = vunpack.c.h.b16 %v117
    %v217 = vunpack.c.l.b16 %v118
    %v218 = vunpack.c.h.b16 %v118
    %v219 = vunpack.c.l.b16 %v119
    %v220 = vunpack.c.h.b16 %v119
    %v221 = vunpack.c.l.b16 %v120
    %v222 = vunpack.c.h.b16 %v120
    %v223 = vunpack.c.l.b16 %v121
    %v224 = vunpack.c.h.b16 %v121
    %v225 = vunpack.c.l.b16 %v122
    %v226 = vunpack.c.h.b16 %v122
    %v227 = vunpack.c.l.b16 %v123
    %v228 = vunpack.c.h.b16 %v123
    %v229 = vunpack.c.l.b16 %v124
    %v230 = vunpack.c.h.b16 %v124
    %v231 = vunpack.c.l.b16 %v125
    %v232 = vunpack.c.h.b16 %v125
    %v233 = vunpack.c.l.b16 %v126
    %v234 = vunpack.c.h.b16 %v126
    %v235 = vunpack.c.l.b16 %v127
    %v236 = vunpack.c.h.b16 %v127
    %v237 = vunpack.c.l.b16 %v128
    %v238 = vunpack.c.h.b16 %v128
    %v239 = vunpack.c.l.b16 %v129
    %v240 = vunpack.c.h.b16 %v129
    %v241 = vunpack.c.l.b16 %v130
    %v242 = vunpack.c.h.b16 %v130
    %v243 = vunpack.c.l.b16 %v131
    %v244 = vunpack.c.h.b16 %v131
    %v245 = vunpack.c.l.b16 %v132
    %v246 = vunpack.c.h.b16 %v132
    %v247 = vunpack.c.l.b16 %v133
    %v248 = vunpack.c.h.b16 %v133
    %v249 = vunpack.c.l.b16 %v134
    %v250 = vunpack.c.h.b16 %v134
    %v251 = vunpack.c.l.b16 %v135
    %v252 = vunpack.c.h.b16 %v135
    %v253 = vunpack.c.l.b16 %v136
    %v254 = vunpack.c.h.b16 %v136
    %v255 = vunpack.c.l.b16 %v137
    %v256 = vunpack.c.h.b16 %v137
    %v257 = vunpack.c.l.b16 %v138
    %v258 = vunpack.c.h.b16 %v138
    %v259 = vunpack.c.l.b16 %v139
    %v260 = vunpack.c.h.b16 %v139
    %v261 = vunpack.c.l.b16 %v140
    %v262 = vunpack.c.h.b16 %v140
    %v263 = vunpack.c.l.b16 %v141
    %v264 = vunpack.c.h.b16 %v141
    %v265 = vunpack.c.l.b16 %v142
    %v266 = vunpack.c.h.b16 %v142
    %v267 = vunpack.c.l.b16 %v143
    %v268 = vunpack.c.h.b16 %v143
    %v269 = vunpack.c.l.b16 %v144
    %v270 = vunpack.c.h.b16 %v144
    %v271 = vunpack.c.l.b16 %v145
    %v272 = vunpack.c.h.b16 %v145
    %v273 = vunpack.c.l.b16 %v146
    %v274 = vunpack.c.h.b16 %v146
    %v275 = vpack.c.b16 %v213, %v211
    %v276 = vpack.c.b16 %v214, %v212
    %v277 = vpack.c.b16 %v217, %v215
    %v278 = vpack.c.b16 %v218, %v216
    %v279 = vpack.c.b16 %v221, %v219
    %v280 = vpack.c.b16 %v222, %v220
    %v281 = vpack.c.b16 %v225, %v223
    %v282 = vpack.c.b16 %v226, %v224
    %v283 = vpack.c.b16 %v229, %v227
    %v284 = vpack.c.b16 %v230, %v228
    %v285 = vpack.c.b16 %v233, %v231
    %v286 = vpack.c.b16 %v234, %v232
    %v287 = vpack.c.b16 %v237, %v235
    %v288 = vpack.c.b16 %v238, %v236
    %v289 = vpack.c.b16 %v241, %v239
    %v290 = vpack.c.b16 %v242, %v240
    %v291 = vpack.c.b16 %v245, %v243
    %v292 = vpack.c.b16 %v246, %v244
    %v293 = vpack.c.b16 %v249, %v247
    %v294 = vpack.c.b16 %v250, %v248
    %v295 = vpack.c.b16 %v253, %v251
    %v296 = vpack.c.b16 %v254, %v252
    %v297 = vpack.c.b16 %v257, %v255
    %v298 = vpack.c.b16 %v258, %v256
    %v299 = vpack.c.b16 %v261, %v259
    %v300 = vpack.c.b16 %v262, %v260
    %v301 = vpack.c.b16 %v265, %v263
    %v302 = vpack.c.b16 %v266, %v264
    %v303 = vpack.c.b16 %v269, %v267
    %v304 = vpack.c.b16 %v270, %v268
    %v305 = vpack.c.b16 %v273, %v271
    %v306 = vpack.c.b16 %v274, %v272
    %v371 = vunpack.c.l.b16 %v147
    %v372 = vunpack.c.l.b16 %v148
    %v373 = vunpack.c.l.b16 %v149
    %v374 = vunpack.c.l.b16 %v150
    %v375 = vunpack.c.l.b16 %v151
    %v376 = vunpack.c.l.b16 %v152
    %v377 = vunpack.c.l.b16 %v153
    %v378 = vunpack.c.l.b16 %v154
    %v379 = vunpack.c.l.b16 %v155
    %v380 = vunpack.c.l.b16 %v156
    %v381 = vunpack.c.l.b16 %v157
    %v382 = vunpack.c.l.b16 %v158
    %v383 = vunpack.c.l.b16 %v159
    %v384 = vunpack.c.l.b16 %v160
    %v385 = vunpack.c.l.b16 %v161
    %v386 = vunpack.c.l.b16 %v162
    %v387 = vunpack.c.l.b16 %v163
    %v388 = vunpack.c.l.b16 %v164
    %v389 = vunpack.c.l.b16 %v165
    %v390 = vunpack.c.l.b16 %v166
    %v391 = vunpack.c.l.b16 %v167
    %v392 = vunpack.c.l.b16 %v168
    %v393 = vunpack.c.l.b16 %v169
    %v394 = vunpack.c.l.b16 %v170
    %v395 = vunpack.c.l.b16 %v171
    %v396 = vunpack.c.l.b16 %v172
    %v397 = vunpack.c.l.b16 %v173
    %v398 = vunpack.c.l.b16 %v174
    %v399 = vunpack.c.l.b16 %v175
    %v400 = vunpack.c.l.b16 %v176
    %v401 = vunpack.c.l.b16 %v177
    %v402 = vunpack.c.l.b16 %v178
    %v403 = vpack.c.b16 %v372, %v371
    %v404 = vpack.c.b16 %v374, %v373
    %v405 = vpack.c.b16 %v376, %v375
    %v406 = vpack.c.b16 %v378, %v377
    %v407 = vpack.c.b16 %v380, %v379
    %v408 = vpack.c.b16 %v382, %v381
    %v409 = vpack.c.b16 %v384, %v383
    %v410 = vpack.c.b16 %v386, %v385
    %v411 = vpack.c.b16 %v388, %v387
    %v412 = vpack.c.b16 %v390, %v389
    %v413 = vpack.c.b16 %v392, %v391
    %v414 = vpack.c.b16 %v394, %v393
    %v415 = vpack.c.b16 %v396, %v395
    %v416 = vpack.c.b16 %v398, %v397
    %v417 = vpack.c.b16 %v400, %v399
    %v418 = vpack.c.b16 %v402, %v401
    %435 = vmatprep.subr.bf16.mxu0 0
    %436 = vmatpush1.bf16.msra.mxu0 %v403
    %437 = vmatprep.subr.bf16.mxu0 0
    %438 = vmatpush1.bf16.msra.mxu0 %v404
    %439 = vmatprep.subr.bf16.mxu0 0
    %440 = vmatpush1.bf16.msra.mxu0 %v405
    %441 = vmatprep.subr.bf16.mxu0 0
    %442 = vmatpush1.bf16.msra.mxu0 %v406
    %443 = vmatprep.subr.bf16.mxu0 0
    %444 = vmatpush1.bf16.msra.mxu0 %v407
    %445 = vmatprep.subr.bf16.mxu0 0
    %446 = vmatpush1.bf16.msra.mxu0 %v408
    %447 = vmatprep.subr.bf16.mxu0 0
    %448 = vmatpush1.bf16.msra.mxu0 %v409
    %449 = vmatprep.subr.bf16.mxu0 0
    %450 = vmatpush1.bf16.msra.mxu0 %v410
    %451 = vmatprep.subr.bf16.mxu0 0
    %452 = vmatpush1.bf16.msra.mxu0 %v411
    %453 = vmatprep.subr.bf16.mxu0 0
    %454 = vmatpush1.bf16.msra.mxu0 %v412
    %455 = vmatprep.subr.bf16.mxu0 0
    %456 = vmatpush1.bf16.msra.mxu0 %v413
    %457 = vmatprep.subr.bf16.mxu0 0
    %458 = vmatpush1.bf16.msra.mxu0 %v414
    %459 = vmatprep.subr.bf16.mxu0 0
    %460 = vmatpush1.bf16.msra.mxu0 %v415
    %461 = vmatprep.subr.bf16.mxu0 0
    %462 = vmatpush1.bf16.msra.mxu0 %v416
    %463 = vmatprep.subr.bf16.mxu0 0
    %464 = vmatpush1.bf16.msra.mxu0 %v417
    %465 = vmatprep.subr.bf16.mxu0 0
    %466 = vmatpush1.bf16.msra.mxu0 %v418
    %467 = vmatprep.mubr.bf16.mxu0 %v276
    %468 = vmatmul.mubr.bf16.gmra.mrb[0].mxu0 %v275
    %v469 = vpop.f32.mrb[0].mxu0
    %v470 = vadd.f32 0.0, %v469
    %v471 = vpop.f32.mrb[0].mxu0
    %v472 = vpop.f32.mrb[0].mxu0
    %v473 = vadd.f32 0.0, %v472
    %v474 = vpop.f32.mrb[0].mxu0
    %475 = vmatprep.mubr.bf16.mxu0 %v278
    %476 = vmatmul.mubr.bf16.gmra.mrb[0].mxu0 %v277
    %v477 = vpop.f32.mrb[0].mxu0
    %v478 = vadd.f32 0.0, %v477
    %v479 = vpop.f32.mrb[0].mxu0
    %v480 = vpop.f32.mrb[0].mxu0
    %v481 = vadd.f32 0.0, %v480
    %v482 = vpop.f32.mrb[0].mxu0
    %483 = vmatprep.mubr.bf16.mxu0 %v280
    %484 = vmatmul.mubr.bf16.gmra.mrb[0].mxu0 %v279
    %v485 = vpop.f32.mrb[0].mxu0
    %v486 = vadd.f32 0.0, %v485
    %v487 = vpop.f32.mrb[0].mxu0
    %v488 = vpop.f32.mrb[0].mxu0
    %v489 = vadd.f32 0.0, %v488
    %v490 = vpop.f32.mrb[0].mxu0
    %491 = vmatprep.mubr.bf16.mxu0 %v282
    %492 = vmatmul.mubr.bf16.gmra.mrb[0].mxu0 %v281
    %v493 = vpop.f32.mrb[0].mxu0
    %v494 = vadd.f32 0.0, %v493
    %v495 = vpop.f32.mrb[0].mxu0
    %v496 = vpop.f32.mrb[0].mxu0
    %v497 = vadd.f32 0.0, %v496
    %v498 = vpop.f32.mrb[0].mxu0
    %499 = vmatprep.mubr.bf16.mxu0 %v284
    %500 = vmatmul.mubr.bf16.gmra.mrb[0].mxu0 %v283
    %v501 = vpop.f32.mrb[0].mxu0
    %v502 = vadd.f32 0.0, %v501
    %v503 = vpop.f32.mrb[0].mxu0
    %v504 = vpop.f32.mrb[0].mxu0
    %v505 = vadd.f32 0.0, %v504
    %v506 = vpop.f32.mrb[0].mxu0
    %507 = vmatprep.mubr.bf16.mxu0 %v286
    %508 = vmatmul.mubr.bf16.gmra.mrb[0].mxu0 %v285
    %v509 = vpop.f32.mrb[0].mxu0
    %v510 = vadd.f32 0.0, %v509
    %v511 = vpop.f32.mrb[0].mxu0
    %v512 = vpop.f32.mrb[0].mxu0
    %v513 = vadd.f32 0.0, %v512
    %v514 = vpop.f32.mrb[0].mxu0
    %515 = vmatprep.mubr.bf16.mxu0 %v288
    %516 = vmatmul.mubr.bf16.gmra.mrb[0].mxu0 %v287
    %v517 = vpop.f32.mrb[0].mxu0
    %v518 = vadd.f32 0.0, %v517
    %v519 = vpop.f32.mrb[0].mxu0
    %v520 = vpop.f32.mrb[0].mxu0
    %v521 = vadd.f32 0.0, %v520
    %v522 = vpop.f32.mrb[0].mxu0
    %523 = vmatprep.mubr.bf16.mxu0 %v290
    %524 = vmatmul.mubr.bf16.gmra.mrb[0].mxu0 %v289
    %v525 = vpop.f32.mrb[0].mxu0
    %v526 = vadd.f32 0.0, %v525
    %v527 = vpop.f32.mrb[0].mxu0
    %v528 = vpop.f32.mrb[0].mxu0
    %v529 = vadd.f32 0.0, %v528
    %v530 = vpop.f32.mrb[0].mxu0
    %531 = vmatprep.mubr.bf16.mxu0 %v292
    %532 = vmatmul.mubr.bf16.gmra.mrb[0].mxu0 %v291
    %v533 = vpop.f32.mrb[0].mxu0
    %v534 = vadd.f32 0.0, %v533
    %v535 = vpop.f32.mrb[0].mxu0
    %v536 = vpop.f32.mrb[0].mxu0
    %v537 = vadd.f32 0.0, %v536
    %v538 = vpop.f32.mrb[0].mxu0
    %539 = vmatprep.mubr.bf16.mxu0 %v294
    %540 = vmatmul.mubr.bf16.gmra.mrb[0].mxu0 %v293
    %v541 = vpop.f32.mrb[0].mxu0
    %v542 = vadd.f32 0.0, %v541
    %v543 = vpop.f32.mrb[0].mxu0
    %v544 = vpop.f32.mrb[0].mxu0
    %v545 = vadd.f32 0.0, %v544
    %v546 = vpop.f32.mrb[0].mxu0
    %547 = vmatprep.mubr.bf16.mxu0 %v296
    %548 = vmatmul.mubr.bf16.gmra.mrb[0].mxu0 %v295
    %v549 = vpop.f32.mrb[0].mxu0
    %v550 = vadd.f32 0.0, %v549
    %v551 = vpop.f32.mrb[0].mxu0
    %v552 = vpop.f32.mrb[0].mxu0
    %v553 = vadd.f32 0.0, %v552
    %v554 = vpop.f32.mrb[0].mxu0
    %555 = vmatprep.mubr.bf16.mxu0 %v298
    %556 = vmatmul.mubr.bf16.gmra.mrb[0].mxu0 %v297
    %v557 = vpop.f32.mrb[0].mxu0
    %v558 = vadd.f32 0.0, %v557
    %v559 = vpop.f32.mrb[0].mxu0
    %v560 = vpop.f32.mrb[0].mxu0
    %v561 = vadd.f32 0.0, %v560
    %v562 = vpop.f32.mrb[0].mxu0
    %563 = vmatprep.mubr.bf16.mxu0 %v300
    %564 = vmatmul.mubr.bf16.gmra.mrb[0].mxu0 %v299
    %v565 = vpop.f32.mrb[0].mxu0
    %v566 = vadd.f32 0.0, %v565
    %v567 = vpop.f32.mrb[0].mxu0
    %v568 = vpop.f32.mrb[0].mxu0
    %v569 = vadd.f32 0.0, %v568
    %v570 = vpop.f32.mrb[0].mxu0
    %571 = vmatprep.mubr.bf16.mxu0 %v302
    %572 = vmatmul.mubr.bf16.gmra.mrb[0].mxu0 %v301
    %v573 = vpop.f32.mrb[0].mxu0
    %v574 = vadd.f32 0.0, %v573
    %v575 = vpop.f32.mrb[0].mxu0
    %v576 = vpop.f32.mrb[0].mxu0
    %v577 = vadd.f32 0.0, %v576
    %v578 = vpop.f32.mrb[0].mxu0
    %579 = vmatprep.mubr.bf16.mxu0 %v304
    %580 = vmatmul.mubr.bf16.gmra.mrb[0].mxu0 %v303
    %v581 = vpop.f32.mrb[0].mxu0
    %v582 = vadd.f32 0.0, %v581
    %v583 = vpop.f32.mrb[0].mxu0
    %v584 = vpop.f32.mrb[0].mxu0
    %v585 = vadd.f32 0.0, %v584
    %v586 = vpop.f32.mrb[0].mxu0
    %587 = vmatprep.mubr.bf16.mxu0 %v306
    %588 = vmatmul.mubr.bf16.gmra.mrb[0].mxu0 %v305
    %v589 = vpop.f32.mrb[0].mxu0
    %v590 = vadd.f32 0.0, %v589
    %v591 = vpop.f32.mrb[0].mxu0
    %v592 = vpop.f32.mrb[0].mxu0
    %v593 = vadd.f32 0.0, %v592
    %v594 = vpop.f32.mrb[0].mxu0
    %595 = vdwg.mxu0
    %v596 = vadd.f32 %v83, %v470
    %v597 = vadd.f32 %v84, %v473
    %v598 = vadd.f32 %v85, %v478
    %v599 = vadd.f32 %v86, %v481
    %v600 = vadd.f32 %v87, %v486
    %v601 = vadd.f32 %v88, %v489
    %v602 = vadd.f32 %v89, %v494
    %v603 = vadd.f32 %v90, %v497
    %v604 = vadd.f32 %v91, %v502
    %v605 = vadd.f32 %v92, %v505
    %v606 = vadd.f32 %v93, %v510
    %v607 = vadd.f32 %v94, %v513
    %v608 = vadd.f32 %v95, %v518
    %v609 = vadd.f32 %v96, %v521
    %v610 = vadd.f32 %v97, %v526
    %v611 = vadd.f32 %v98, %v529
    %v612 = vadd.f32 %v99, %v534
    %v613 = vadd.f32 %v100, %v537
    %v614 = vadd.f32 %v101, %v542
    %v615 = vadd.f32 %v102, %v545
    %v616 = vadd.f32 %v103, %v550
    %v617 = vadd.f32 %v104, %v553
    %v618 = vadd.f32 %v105, %v558
    %v619 = vadd.f32 %v106, %v561
    %v620 = vadd.f32 %v107, %v566
    %v621 = vadd.f32 %v108, %v569
    %v622 = vadd.f32 %v109, %v574
    %v623 = vadd.f32 %v110, %v577
    %v624 = vadd.f32 %v111, %v582
    %v625 = vadd.f32 %v112, %v585
    %v626 = vadd.f32 %v113, %v590
    %v627 = vadd.f32 %v114, %v593
    %628 = vst [vmem:[#allocation2] sm:$0xff] %v596
    %629 = vst [vmem:[#allocation2 + $0x8] sm:$0xff] %v597
    %630 = vst [vmem:[#allocation2 + $0x10] sm:$0xff] %v598
    %631 = vst [vmem:[#allocation2 + $0x18] sm:$0xff] %v599
    %632 = vst [vmem:[#allocation2 + $0x20] sm:$0xff] %v600
    %633 = vst [vmem:[#allocation2 + $0x28] sm:$0xff] %v601
    %634 = vst [vmem:[#allocation2 + $0x30] sm:$0xff] %v602
    %635 = vst [vmem:[#allocation2 + $0x38] sm:$0xff] %v603
    %636 = vst [vmem:[#allocation2 + $0x40] sm:$0xff] %v604
    %637 = vst [vmem:[#allocation2 + $0x48] sm:$0xff] %v605
    %638 = vst [vmem:[#allocation2 + $0x50] sm:$0xff] %v606
    %639 = vst [vmem:[#allocation2 + $0x58] sm:$0xff] %v607
    %640 = vst [vmem:[#allocation2 + $0x60] sm:$0xff] %v608
    %641 = vst [vmem:[#allocation2 + $0x68] sm:$0xff] %v609
    %642 = vst [vmem:[#allocation2 + $0x70] sm:$0xff] %v610
    %643 = vst [vmem:[#allocation2 + $0x78] sm:$0xff] %v611
    %644 = vst [vmem:[#allocation2 + $0x80] sm:$0xff] %v612
    %645 = vst [vmem:[#allocation2 + $0x88] sm:$0xff] %v613
    %646 = vst [vmem:[#allocation2 + $0x90] sm:$0xff] %v614
    %647 = vst [vmem:[#allocation2 + $0x98] sm:$0xff] %v615
    %648 = vst [vmem:[#allocation2 + $0xa0] sm:$0xff] %v616
    %649 = vst [vmem:[#allocation2 + $0xa8] sm:$0xff] %v617
    %650 = vst [vmem:[#allocation2 + $0xb0] sm:$0xff] %v618
    %651 = vst [vmem:[#allocation2 + $0xb8] sm:$0xff] %v619
    %652 = vst [vmem:[#allocation2 + $0xc0] sm:$0xff] %v620
    %653 = vst [vmem:[#allocation2 + $0xc8] sm:$0xff] %v621
    %654 = vst [vmem:[#allocation2 + $0xd0] sm:$0xff] %v622
    %655 = vst [vmem:[#allocation2 + $0xd8] sm:$0xff] %v623
    %656 = vst [vmem:[#allocation2 + $0xe0] sm:$0xff] %v624
    %657 = vst [vmem:[#allocation2 + $0xe8] sm:$0xff] %v625
    %658 = vst [vmem:[#allocation2 + $0xf0] sm:$0xff] %v626
    %659 = vst [vmem:[#allocation2 + $0xf8] sm:$0xff] %v627
    // Predicated region
    $region30: #{tpu_custom_call.1} parent=1 // pred_check
      %p660 = pneg %p47
    $region31: #{tpu_custom_call.1} parent=1 // pred_check_branch
      %662 = sbr.rel (%p660) target = $region33
    $region32: #{tpu_custom_call.1} parent=1 // pred_region
      %v663 = vld [vmem:[#allocation2] sm:$0xff]
      %v664 = vld [vmem:[#allocation2 + $0x8] sm:$0xff]
      %v665 = vld [vmem:[#allocation2 + $0x10] sm:$0xff]
      %v666 = vld [vmem:[#allocation2 + $0x18] sm:$0xff]
      %v667 = vld [vmem:[#allocation2 + $0x20] sm:$0xff]
      %v668 = vld [vmem:[#allocation2 + $0x28] sm:$0xff]
      %v669 = vld [vmem:[#allocation2 + $0x30] sm:$0xff]
      %v670 = vld [vmem:[#allocation2 + $0x38] sm:$0xff]
      %v671 = vld [vmem:[#allocation2 + $0x40] sm:$0xff]
      %v672 = vld [vmem:[#allocation2 + $0x48] sm:$0xff]
      %v673 = vld [vmem:[#allocation2 + $0x50] sm:$0xff]
      %v674 = vld [vmem:[#allocation2 + $0x58] sm:$0xff]
      %v675 = vld [vmem:[#allocation2 + $0x60] sm:$0xff]
      %v676 = vld [vmem:[#allocation2 + $0x68] sm:$0xff]
      %v677 = vld [vmem:[#allocation2 + $0x70] sm:$0xff]
      %v678 = vld [vmem:[#allocation2 + $0x78] sm:$0xff]
      %v679 = vld [vmem:[#allocation2 + $0x80] sm:$0xff]
      %v680 = vld [vmem:[#allocation2 + $0x88] sm:$0xff]
      %v681 = vld [vmem:[#allocation2 + $0x90] sm:$0xff]
      %v682 = vld [vmem:[#allocation2 + $0x98] sm:$0xff]
      %v683 = vld [vmem:[#allocation2 + $0xa0] sm:$0xff]
      %v684 = vld [vmem:[#allocation2 + $0xa8] sm:$0xff]
      %v685 = vld [vmem:[#allocation2 + $0xb0] sm:$0xff]
      %v686 = vld [vmem:[#allocation2 + $0xb8] sm:$0xff]
      %v687 = vld [vmem:[#allocation2 + $0xc0] sm:$0xff]
      %v688 = vld [vmem:[#allocation2 + $0xc8] sm:$0xff]
      %v689 = vld [vmem:[#allocation2 + $0xd0] sm:$0xff]
      %v690 = vld [vmem:[#allocation2 + $0xd8] sm:$0xff]
      %v691 = vld [vmem:[#allocation2 + $0xe0] sm:$0xff]
      %v692 = vld [vmem:[#allocation2 + $0xe8] sm:$0xff]
      %v693 = vld [vmem:[#allocation2 + $0xf0] sm:$0xff]
      %v694 = vld [vmem:[#allocation2 + $0xf8] sm:$0xff]
      %v695 = vld [vmem:[%s2] sm:$0x1]
      %v697 = vlaneseq
      %v698 = vshrl.u32 %v697, 7
      %v699 = vsub.s32 0, %v698
      %v700 = vrot.slane %v695, %v699
      %v702 = vmul.f32 %v663, %v700
      %v703 = vmul.f32 %v664, %v700
      %v704 = vmul.f32 %v665, %v700
      %v705 = vmul.f32 %v666, %v700
      %v706 = vmul.f32 %v667, %v700
      %v707 = vmul.f32 %v668, %v700
      %v708 = vmul.f32 %v669, %v700
      %v709 = vmul.f32 %v670, %v700
      %v710 = vmul.f32 %v671, %v700
      %v711 = vmul.f32 %v672, %v700
      %v712 = vmul.f32 %v673, %v700
      %v713 = vmul.f32 %v674, %v700
      %v714 = vmul.f32 %v675, %v700
      %v715 = vmul.f32 %v676, %v700
      %v716 = vmul.f32 %v677, %v700
      %v717 = vmul.f32 %v678, %v700
      %v718 = vmul.f32 %v679, %v700
      %v719 = vmul.f32 %v680, %v700
      %v720 = vmul.f32 %v681, %v700
      %v721 = vmul.f32 %v682, %v700
      %v722 = vmul.f32 %v683, %v700
      %v723 = vmul.f32 %v684, %v700
      %v724 = vmul.f32 %v685, %v700
      %v725 = vmul.f32 %v686, %v700
      %v726 = vmul.f32 %v687, %v700
      %v727 = vmul.f32 %v688, %v700
      %v728 = vmul.f32 %v689, %v700
      %v729 = vmul.f32 %v690, %v700
      %v730 = vmul.f32 %v691, %v700
      %v731 = vmul.f32 %v692, %v700
      %v732 = vmul.f32 %v693, %v700
      %v733 = vmul.f32 %v694, %v700
      %v734 = vld [vmem:[%s3] sm:$0x1]
      %v736 = vlaneseq
      %v737 = vshrl.u32 %v736, 7
      %v738 = vsub.s32 0, %v737
      %v739 = vrot.slane %v734, %v738
      %v741 = vadd.f32 %v702, %v739
      %v742 = vadd.f32 %v703, %v739
      %v743 = vadd.f32 %v704, %v739
      %v744 = vadd.f32 %v705, %v739
      %v745 = vadd.f32 %v706, %v739
      %v746 = vadd.f32 %v707, %v739
      %v747 = vadd.f32 %v708, %v739
      %v748 = vadd.f32 %v709, %v739
      %v749 = vadd.f32 %v710, %v739
      %v750 = vadd.f32 %v711, %v739
      %v751 = vadd.f32 %v712, %v739
      %v752 = vadd.f32 %v713, %v739
      %v753 = vadd.f32 %v714, %v739
      %v754 = vadd.f32 %v715, %v739
      %v755 = vadd.f32 %v716, %v739
      %v756 = vadd.f32 %v717, %v739
      %v757 = vadd.f32 %v718, %v739
      %v758 = vadd.f32 %v719, %v739
      %v759 = vadd.f32 %v720, %v739
      %v760 = vadd.f32 %v721, %v739
      %v761 = vadd.f32 %v722, %v739
      %v762 = vadd.f32 %v723, %v739
      %v763 = vadd.f32 %v724, %v739
      %v764 = vadd.f32 %v725, %v739
      %v765 = vadd.f32 %v726, %v739
      %v766 = vadd.f32 %v727, %v739
      %v767 = vadd.f32 %v728, %v739
      %v768 = vadd.f32 %v729, %v739
      %v769 = vadd.f32 %v730, %v739
      %v770 = vadd.f32 %v731, %v739
      %v771 = vadd.f32 %v732, %v739
      %v772 = vadd.f32 %v733, %v739
      %v773 = vmax.f32 %v741, 0.0
      %v774 = vmax.f32 %v742, 0.0
      %v775 = vmax.f32 %v743, 0.0
      %v776 = vmax.f32 %v744, 0.0
      %v777 = vmax.f32 %v745, 0.0
      %v778 = vmax.f32 %v746, 0.0
      %v779 = vmax.f32 %v747, 0.0
      %v780 = vmax.f32 %v748, 0.0
      %v781 = vmax.f32 %v749, 0.0
      %v782 = vmax.f32 %v750, 0.0
      %v783 = vmax.f32 %v751, 0.0
      %v784 = vmax.f32 %v752, 0.0
      %v785 = vmax.f32 %v753, 0.0
      %v786 = vmax.f32 %v754, 0.0
      %v787 = vmax.f32 %v755, 0.0
      %v788 = vmax.f32 %v756, 0.0
      %v789 = vmax.f32 %v757, 0.0
      %v790 = vmax.f32 %v758, 0.0
      %v791 = vmax.f32 %v759, 0.0
      %v792 = vmax.f32 %v760, 0.0
      %v793 = vmax.f32 %v761, 0.0
      %v794 = vmax.f32 %v762, 0.0
      %v795 = vmax.f32 %v763, 0.0
      %v796 = vmax.f32 %v764, 0.0
      %v797 = vmax.f32 %v765, 0.0
      %v798 = vmax.f32 %v766, 0.0
      %v799 = vmax.f32 %v767, 0.0
      %v800 = vmax.f32 %v768, 0.0
      %v801 = vmax.f32 %v769, 0.0
      %v802 = vmax.f32 %v770, 0.0
      %v803 = vmax.f32 %v771, 0.0
      %v804 = vmax.f32 %v772, 0.0
      %v805 = vpack.c.bf16 %v774, %v773
      %v806 = vpack.c.bf16 %v776, %v775
      %v807 = vpack.c.bf16 %v778, %v777
      %v808 = vpack.c.bf16 %v780, %v779
      %v809 = vpack.c.bf16 %v782, %v781
      %v810 = vpack.c.bf16 %v784, %v783
      %v811 = vpack.c.bf16 %v786, %v785
      %v812 = vpack.c.bf16 %v788, %v787
      %v813 = vpack.c.bf16 %v790, %v789
      %v814 = vpack.c.bf16 %v792, %v791
      %v815 = vpack.c.bf16 %v794, %v793
      %v816 = vpack.c.bf16 %v796, %v795
      %v817 = vpack.c.bf16 %v798, %v797
      %v818 = vpack.c.bf16 %v800, %v799
      %v819 = vpack.c.bf16 %v802, %v801
      %v820 = vpack.c.bf16 %v804, %v803
      %v837 = vunpack.c.l.b16 %v805
      %v838 = vunpack.c.h.b16 %v805
      %v839 = vunpack.c.l.b16 %v806
      %v840 = vunpack.c.h.b16 %v806
      %v841 = vunpack.c.l.b16 %v807
      %v842 = vunpack.c.h.b16 %v807
      %v843 = vunpack.c.l.b16 %v808
      %v844 = vunpack.c.h.b16 %v808
      %v845 = vunpack.c.l.b16 %v809
      %v846 = vunpack.c.h.b16 %v809
      %v847 = vunpack.c.l.b16 %v810
      %v848 = vunpack.c.h.b16 %v810
      %v849 = vunpack.c.l.b16 %v811
      %v850 = vunpack.c.h.b16 %v811
      %v851 = vunpack.c.l.b16 %v812
      %v852 = vunpack.c.h.b16 %v812
      %v853 = vunpack.c.l.b16 %v813
      %v854 = vunpack.c.h.b16 %v813
      %v855 = vunpack.c.l.b16 %v814
      %v856 = vunpack.c.h.b16 %v814
      %v857 = vunpack.c.l.b16 %v815
      %v858 = vunpack.c.h.b16 %v815
      %v859 = vunpack.c.l.b16 %v816
      %v860 = vunpack.c.h.b16 %v816
      %v861 = vunpack.c.l.b16 %v817
      %v862 = vunpack.c.h.b16 %v817
      %v863 = vunpack.c.l.b16 %v818
      %v864 = vunpack.c.h.b16 %v818
      %v865 = vunpack.c.l.b16 %v819
      %v866 = vunpack.c.h.b16 %v819
      %v867 = vunpack.c.l.b16 %v820
      %v868 = vunpack.c.h.b16 %v820
      %v869 = vpack.c.b16 %v837, %v837
      %v870 = vpack.c.b16 %v838, %v838
      %v871 = vpack.c.b16 %v839, %v839
      %v872 = vpack.c.b16 %v840, %v840
      %v873 = vpack.c.b16 %v841, %v841
      %v874 = vpack.c.b16 %v842, %v842
      %v875 = vpack.c.b16 %v843, %v843
      %v876 = vpack.c.b16 %v844, %v844
      %v877 = vpack.c.b16 %v845, %v845
      %v878 = vpack.c.b16 %v846, %v846
      %v879 = vpack.c.b16 %v847, %v847
      %v880 = vpack.c.b16 %v848, %v848
      %v881 = vpack.c.b16 %v849, %v849
      %v882 = vpack.c.b16 %v850, %v850
      %v883 = vpack.c.b16 %v851, %v851
      %v884 = vpack.c.b16 %v852, %v852
      %v885 = vpack.c.b16 %v853, %v853
      %v886 = vpack.c.b16 %v854, %v854
      %v887 = vpack.c.b16 %v855, %v855
      %v888 = vpack.c.b16 %v856, %v856
      %v889 = vpack.c.b16 %v857, %v857
      %v890 = vpack.c.b16 %v858, %v858
      %v891 = vpack.c.b16 %v859, %v859
      %v892 = vpack.c.b16 %v860, %v860
      %v893 = vpack.c.b16 %v861, %v861
      %v894 = vpack.c.b16 %v862, %v862
      %v895 = vpack.c.b16 %v863, %v863
      %v896 = vpack.c.b16 %v864, %v864
      %v897 = vpack.c.b16 %v865, %v865
      %v898 = vpack.c.b16 %v866, %v866
      %v899 = vpack.c.b16 %v867, %v867
      %v900 = vpack.c.b16 %v868, %v868
      %933 = vst [vmem:[#allocation8] sm:$0xf] %v869
      %934 = vst [vmem:[#allocation8 + $0x4] sm:$0xf] %v870
      %935 = vst [vmem:[#allocation8 + $0x8] sm:$0xf] %v871
      %936 = vst [vmem:[#allocation8 + $0xc] sm:$0xf] %v872
      %937 = vst [vmem:[#allocation8 + $0x10] sm:$0xf] %v873
      %938 = vst [vmem:[#allocation8 + $0x14] sm:$0xf] %v874
      %939 = vst [vmem:[#allocation8 + $0x18] sm:$0xf] %v875
      %940 = vst [vmem:[#allocation8 + $0x1c] sm:$0xf] %v876
      %941 = vst [vmem:[#allocation8 + $0x20] sm:$0xf] %v877
      %942 = vst [vmem:[#allocation8 + $0x24] sm:$0xf] %v878
      %943 = vst [vmem:[#allocation8 + $0x28] sm:$0xf] %v879
      %944 = vst [vmem:[#allocation8 + $0x2c] sm:$0xf] %v880
      %945 = vst [vmem:[#allocation8 + $0x30] sm:$0xf] %v881
      %946 = vst [vmem:[#allocation8 + $0x34] sm:$0xf] %v882
      %947 = vst [vmem:[#allocation8 + $0x38] sm:$0xf] %v883
      %948 = vst [vmem:[#allocation8 + $0x3c] sm:$0xf] %v884
      %949 = vst [vmem:[#allocation8 + $0x40] sm:$0xf] %v885
      %950 = vst [vmem:[#allocation8 + $0x44] sm:$0xf] %v886
      %951 = vst [vmem:[#allocation8 + $0x48] sm:$0xf] %v887
      %952 = vst [vmem:[#allocation8 + $0x4c] sm:$0xf] %v888
      %953 = vst [vmem:[#allocation8 + $0x50] sm:$0xf] %v889
      %954 = vst [vmem:[#allocation8 + $0x54] sm:$0xf] %v890
      %955 = vst [vmem:[#allocation8 + $0x58] sm:$0xf] %v891
      %956 = vst [vmem:[#allocation8 + $0x5c] sm:$0xf] %v892
      %957 = vst [vmem:[#allocation8 + $0x60] sm:$0xf] %v893
      %958 = vst [vmem:[#allocation8 + $0x64] sm:$0xf] %v894
      %959 = vst [vmem:[#allocation8 + $0x68] sm:$0xf] %v895
      %960 = vst [vmem:[#allocation8 + $0x6c] sm:$0xf] %v896
      %961 = vst [vmem:[#allocation8 + $0x70] sm:$0xf] %v897
      %962 = vst [vmem:[#allocation8 + $0x74] sm:$0xf] %v898
      %963 = vst [vmem:[#allocation8 + $0x78] sm:$0xf] %v899
      %964 = vst [vmem:[#allocation8 + $0x7c] sm:$0xf] %v900
    $region33: #{tpu_custom_call.1} parent=1 // pred_fallthru
      _
    // Predicated region
    $region34: #{tpu_custom_call.1} parent=1 // pred_check
      _
    $region35: #{tpu_custom_call.1} parent=1 // pred_check_branch
      %966 = sbr.rel (0) target = $region37
    $region36: #{tpu_custom_call.1} parent=1 // pred_region
      %s968 = ssub.s32 2048, 2048
      %969 = vsyncadd [#allocation5], %s968
      %s970 = sshll.u32 [#allocation8], 4
      %s971 = int_to_ptr.vmem [resolvable:$true] %s970
      %976 = dma.vmem_to_hbm [thread:$0]  %s971, 2048, %s4, [#allocation5], 64, 64, 4
    $region37: #{tpu_custom_call.1} parent=1 // pred_fallthru
      _
    // Predicated region
    $region38: #{tpu_custom_call.1} parent=1 // pred_check
      _
    $region39: #{tpu_custom_call.1} parent=1 // pred_check_branch
      %978 = sbr.rel (0) target = $region41
    $region40: #{tpu_custom_call.1} parent=1 // pred_region
      %979 = dma.done [#allocation5], 2048
    $region41: #{tpu_custom_call.1} parent=1 // pred_fallthru
      _
    %980 = vsyncpa [#allocation4], 1
    %981 = vsyncpa [#allocation7], 1
    %982 = vsyncpa [#allocation5], 1

</llo_original>
